<compile_context>
chip_gen: v7x
topology: tpu7x:2x2x1
jax: 0.10.0
libtpu: 0.0.40
codegen_flags: <defaults>
</compile_context>

<pallas_src>
import functools

import jax
import jax.numpy as jnp
from jax.experimental import pallas as pl
from jax.experimental.pallas import tpu as pltpu


def _copy_kernel(x_ref, o_ref):
    # Pure lane-dense tile copy; the chomp is expressed via BlockSpecs, so no
    # in-kernel slice (which would materialize an extra VMEM copy) is needed.
    o_ref[...] = x_ref[...]


def _sublane_multiple(dtype) -> int:
    # Sub-32-bit dtypes pack along sublanes: 8 rows for 4-byte, 16 for 2-byte,
    # 32 for 1-byte elements per vreg.
    itemsize = jnp.dtype(dtype).itemsize
    return {4: 8, 2: 16, 1: 32}.get(itemsize, 8)


def _round_up(x: int, m: int) -> int:
    return ((x + m - 1) // m) * m


@functools.partial(jax.jit, static_argnames=("chomp_size",))
def chomp1d(x: jax.Array, chomp_size: int) -> jax.Array:
    """Pallas equivalent of Chomp1d.forward: x[:, :, :-chomp_size]."""
    assert chomp_size > 0, "chomp_size must be positive"
    n, c, l = x.shape
    l_out = l - chomp_size
    assert l_out > 0, "chomp_size must be smaller than the time axis"

    rows = n * c
    x2 = x.reshape(rows, l)  # free contiguous collapse of (N, C) -> rows

    sub = _sublane_multiple(x.dtype)
    # Lane tile: multiple of 128 (lane-dense stores); capped so the per-step
    # VMEM footprint (2 x double-buffered in+out tiles) stays ~4 MiB.
    tl = min(_round_up(l_out, 128), 1024)
    # Row tile: multiple of the sublane pack so every vreg is fully used.
    tr = min(_round_up(rows, sub), 256)

    grid = (pl.cdiv(rows, tr), pl.cdiv(l_out, tl))

    out2 = pl.pallas_call(
        _copy_kernel,
        out_shape=jax.ShapeDtypeStruct((rows, l_out), x.dtype),
        grid_spec=pltpu.PrefetchScalarGridSpec(
            num_scalar_prefetch=0,
            grid=grid,
            in_specs=[
                # Same block indices as the output: only the kept region of
                # the time axis is ever DMA'd HBM->VMEM; the chomped tail is
                # skipped (except for at most one partial edge tile).
                pl.BlockSpec((tr, tl), lambda i, j: (i, j)),
            ],
            out_specs=pl.BlockSpec((tr, tl), lambda i, j: (i, j)),
        ),
        compiler_params=pltpu.CompilerParams(
            dimension_semantics=("parallel", "parallel"),
        ),
    )(x2)

    return out2.reshape(n, c, l_out)


def _check(x: jax.Array, chomp_size: int) -> None:
    out = jax.block_until_ready(chomp1d(x, chomp_size))
    ref = x[:, :, :-chomp_size]
    assert out.shape == ref.shape, (out.shape, ref.shape)
    assert out.dtype == x.dtype
    assert jnp.array_equal(out, ref), "mismatch vs reference slice"


if __name__ == "__main__":
    key = jax.random.PRNGKey(0)
    k0, k1, k2 = jax.random.split(key, 3)

    # Small shape consistent with the module's (N, C, L) layout.
    x_small = jax.random.normal(k0, (2, 4, 16), dtype=jnp.float32)
    _check(x_small, chomp_size=3)

    # Partial row tile (rows not a multiple of 8) + single lane tile.
    x_mid = jax.random.normal(k1, (3, 5, 300), dtype=jnp.float32)
    _check(x_mid, chomp_size=44)

    # Multiple lane tiles with a masked final column tile.
    x_big = jax.random.normal(k2, (2, 8, 1500), dtype=jnp.float32)
    _check(x_big, chomp_size=7)

    print("KERNEL_OK")
</pallas_src>

<mosaic_0001>
module attributes {stable_mosaic.version = 11 : i64} {
  func.func @_copy_kernel(%arg0: i32, %arg1: i32, %arg2: memref<8x128xf32, #tpu.memory_space<vmem>>, %arg3: memref<8x128xf32, #tpu.memory_space<vmem>>) attributes {dimension_semantics = [#tpu.dimension_semantics<parallel>, #tpu.dimension_semantics<parallel>], iteration_bounds = array<i64: 1, 1>, scalar_prefetch = 0 : i64, scratch_operands = 0 : i64, tpu.core_type = #tpu.core_type<tc>, window_params = [{transform_indices = @transform_0, window_bounds = array<i64: 8, 128>}, {transform_indices = @transform_1, window_bounds = array<i64: 8, 128>}]} {
    %c0 = arith.constant 0 : index
    %c0_0 = arith.constant 0 : index
    %0 = vector.load %arg2[%c0, %c0_0] : memref<8x128xf32, #tpu.memory_space<vmem>>, vector<8x128xf32>
    %c0_1 = arith.constant 0 : index
    %c0_2 = arith.constant 0 : index
    %1 = vector.load %arg3[%c0_1, %c0_2] : memref<8x128xf32, #tpu.memory_space<vmem>>, vector<8x128xf32>
    tpu.vector_store %arg3[%c0_1, %c0_2], %0 {strides = array<i32>} : memref<8x128xf32, #tpu.memory_space<vmem>>, vector<8x128xf32>,
    return
  }
  func.func @transform_0(%arg0: i32, %arg1: i32) -> (i32, i32) {
    %c0_i32 = arith.constant 0 : i32
    return %arg0, %arg1 : i32, i32
  }
  func.func @transform_1(%arg0: i32, %arg1: i32) -> (i32, i32) {
    %c0_i32 = arith.constant 0 : i32
    return %arg0, %arg1 : i32, i32
  }
}

</mosaic_0001>

<llo_original>
// kernel: chomp1d.1
$region0: #{chomp1d.1}
  #allocation0 [shape = 'u32[]', space=smem, size = 0x4, offset = 0x4, fixed_abs, tag = 'smem constant byte address 0x4 - core index']
  #allocation1 [shape = 'u32[144,128]{1,0:T(1,128)}', space=vmem, size = 0x12000, scoped, tag = 'internal scratch']
  %s0 = inlined_call_operand.hbm [shape: f32[8,16], index: 0, kind: input, shape index: {}]
  %s1 = inlined_call_operand.hbm [shape: f32[8,13], index: 1, kind: output, shape index: {}]
  %s2 = sld [smem:[#allocation0]]
  $region18: #{chomp1d.1} parent=0
    _
  %s4 = ssub.s32 1, %s2
  %s5 = scalar_select 0, %s4, %s2
  $region1: #{chomp1d.1} parent=0
    #allocation2 [shape = 'u8[4096]{0}', space=vmem, size = 0x1000, scoped, tag = 'input window, operand 0, single buffered']
    #allocation3 [shape = 's32[1]{0}', space=sflag, size = 0x4, scoped, tag = 'scoped memory for chomp1d.1']
    #allocation4 [shape = 's32[1]{0}', space=sflag, size = 0x4, scoped, tag = 'scoped memory for chomp1d.1']
    #allocation5 [shape = 'u8[4096]{0}', space=vmem, size = 0x1000, scoped, tag = 'output window, operand 0, single buffered']
    %6 = vsyncpa [#allocation3], 0
    %7 = vsyncpa [#allocation4], 0
    // Predicated region
    $region2: #{chomp1d.1} parent=1 // pred_check
      _
    $region3: #{chomp1d.1} parent=1 // pred_check_branch
      %9 = sbr.rel (0) target = $region5
    $region4: #{chomp1d.1} parent=1 // pred_region
      %s11 = ssub.s32 128, 128
      %12 = vsyncadd [#allocation3], %s11
      %s14 = sshll.u32 [#allocation2], 4
      %s15 = int_to_ptr.vmem [resolvable:$true] %s14
      %17 = dma.hbm_to_vmem [thread:$0]  %s0, 128, %s15, [#allocation3]
    $region5: #{chomp1d.1} parent=1 // pred_fallthru
      _
    // Predicated region
    $region6: #{chomp1d.1} parent=1 // pred_check
      _
    $region7: #{chomp1d.1} parent=1 // pred_check_branch
      %19 = sbr.rel (0) target = $region9
    $region8: #{chomp1d.1} parent=1 // pred_region
      %20 = dma.done [#allocation3], 128
    $region9: #{chomp1d.1} parent=1 // pred_fallthru
      _
    %v21 = vld [vmem:[#allocation2] sm:$0xff]
    %22 = vst [vmem:[#allocation5] sm:$0xff] %v21
    // Predicated region
    $region10: #{chomp1d.1} parent=1 // pred_check
      _
    $region11: #{chomp1d.1} parent=1 // pred_check_branch
      %24 = sbr.rel (0) target = $region13
    $region12: #{chomp1d.1} parent=1 // pred_region
      %s26 = ssub.s32 128, 128
      %27 = vsyncadd [#allocation4], %s26
      %s29 = sshll.u32 [#allocation5], 4
      %s30 = int_to_ptr.vmem [resolvable:$true] %s29
      %32 = dma.vmem_to_hbm [thread:$0]  %s30, 128, %s1, [#allocation4]
    $region13: #{chomp1d.1} parent=1 // pred_fallthru
      _
    // Predicated region
    $region14: #{chomp1d.1} parent=1 // pred_check
      _
    $region15: #{chomp1d.1} parent=1 // pred_check_branch
      %34 = sbr.rel (0) target = $region17
    $region16: #{chomp1d.1} parent=1 // pred_region
      %35 = dma.done [#allocation4], 128
    $region17: #{chomp1d.1} parent=1 // pred_fallthru
      _
    %36 = vsyncpa [#allocation3], 1
    %37 = vsyncpa [#allocation4], 1

</llo_original>
